<compile_context>
chip_gen: v5e
topology: v5e:2x2
jax: 0.10.0
libtpu: 0.0.40
codegen_flags: <defaults>
</compile_context>

<pallas_src>
import functools

import jax
import jax.numpy as jnp
from jax.experimental import pallas as pl
from jax.experimental.pallas import tpu as pltpu


def _round_down(x, m):
    return (x // m) * m


def _dice_bce_kernel(pred_ref, tgt_ref, bce_ref, inter_ref, psum_ref, tsum_ref,
                     *, R, HW, TR, TH, GH, mask_rows, mask_cols, approx_sigmoid):
    r = pl.program_id(0)
    p = pl.program_id(1)
    h = pl.program_id(2)

    @pl.when(h == 0)
    def _():
        zeros = jnp.zeros((TR, 1), jnp.float32)
        bce_ref[...] = zeros
        inter_ref[...] = zeros
        psum_ref[...] = zeros
        tsum_ref[...] = zeros

    x = pred_ref[...].astype(jnp.float32)   # logits, (TR, TH)
    t = tgt_ref[...].astype(jnp.float32)    # targets, (TR, TH)

    # Mask edge-block tails BEFORE any transcendental: x = -100 contributes ~0 to
    # the BCE sum and sigmoid(-100) ~ 0 to the dice sums; t = 0 kills x*t and tsum.
    if mask_rows or mask_cols:
        mask = None
        if mask_rows:
            row_ids = jax.lax.broadcasted_iota(jnp.int32, (TR, TH), 0) + r * TR
            mask = row_ids < R
        if mask_cols:
            col_ids = (jax.lax.broadcasted_iota(jnp.int32, (TR, TH), 1)
                       + (p * GH + h) * TH)
            cmask = col_ids < HW
            mask = cmask if mask is None else jnp.logical_and(mask, cmask)
        x = jnp.where(mask, x, -100.0)
        t = jnp.where(mask, t, 0.0)

    # Shared transcendental: e = exp(-|x|) feeds both the stable BCE log-term and
    # the sigmoid (one EUP exp per element).
    e = jnp.exp(-jnp.abs(x))

    # BCEWithLogits (numerically stable): max(x,0) - x*t + log(1 + exp(-|x|)).
    bce = jnp.maximum(x, 0.0) - x * t + jnp.log1p(e)

    # sigmoid(x) == where(x >= 0, 1, e) / (1 + e).
    num = jnp.where(x >= 0.0, 1.0, e)
    if approx_sigmoid:
        sig = num * pl.reciprocal(1.0 + e, approx=True)
    else:
        sig = num / (1.0 + e)

    bce_ref[...] += jnp.sum(bce, axis=-1, keepdims=True)
    inter_ref[...] += jnp.sum(sig * t, axis=-1, keepdims=True)
    psum_ref[...] += jnp.sum(sig, axis=-1, keepdims=True)
    tsum_ref[...] += jnp.sum(t, axis=-1, keepdims=True)


def dice_bce_loss(pred, target, smooth=1.0, *, approx_sigmoid=True,
                  _max_block_elems=None):
    """pred, target: (N, C, H, W). Returns scalar f32 loss = BCEWithLogits + dice.

    Inputs may have different dtypes (e.g. bf16 binary targets to halve their HBM
    read traffic); all compute is in f32.
    """
    assert pred.shape == target.shape
    N, C, H, W = pred.shape
    R = N * C
    HW = H * W

    pred2d = pred.reshape(R, HW)
    tgt2d = target.reshape(R, HW)

    def _sublane(dt):
        it = jnp.dtype(dt).itemsize
        return 8 if it >= 4 else (16 if it == 2 else 32)

    sub = max(_sublane(pred2d.dtype), _sublane(tgt2d.dtype))

    # ---- generation-aware VMEM budget (safe 64 MiB fallback for v7x) ----
    try:
        vmem_cap = int(getattr(pltpu.get_tpu_info(), "vmem_capacity_bytes",
                               64 * 1024 * 1024))
    except Exception:
        vmem_cap = 64 * 1024 * 1024
    vmem_limit = max(32 * 1024 * 1024, min(vmem_cap * 3 // 4, 48 * 1024 * 1024))

    # ~2 MiB per f32 input block already sits at ~85% of HBM roofline and leaves
    # headroom for double-buffered inputs + f32 elementwise temporaries on v7x.
    if _max_block_elems is None:
        max_block_elems = (2 * 1024 * 1024) // 4
    else:
        max_block_elems = int(_max_block_elems)
    max_block_elems = max(max_block_elems, sub * 128)

    # ---- lane (HW) tiling: multiples of 128, or a full-extent block ----
    th_cap = max(128, _round_down(max_block_elems // sub, 128))
    if HW % 128 == 0:
        TH = min(HW, th_cap)
    elif HW <= th_cap:
        TH = HW                      # full-extent lane block (any size allowed)
    else:
        TH = th_cap
    NH = pl.cdiv(HW, TH)
    mask_cols = (HW % TH) != 0

    # ---- row (N*C) tiling: multiples of the sublane pack, or full extent ----
    tr_cap = max(sub, _round_down(max_block_elems // TH, sub))
    if R <= tr_cap:
        TR = R                       # full-extent row block
        GR = 1
    else:
        TR = tr_cap
        GR = pl.cdiv(R, TR)
    mask_rows = (R % TR) != 0
    Rp = GR * TR

    # ---- extra *parallel* split of HW so both v7x TensorCores get work even when
    #      GR == 1; identical total step count on single-core chips. ----
    GP = 2 if (GR == 1 and NH >= 2 and NH % 2 == 0) else 1
    GH = NH // GP

    kernel = functools.partial(
        _dice_bce_kernel, R=R, HW=HW, TR=TR, TH=TH, GH=GH,
        mask_rows=mask_rows, mask_cols=mask_cols, approx_sigmoid=approx_sigmoid)

    def in_map(r, p, h):
        return (r, p * GH + h)

    out_shapes = tuple(jax.ShapeDtypeStruct((GP, Rp, 1), jnp.float32)
                       for _ in range(4))
    out_specs = tuple(pl.BlockSpec((None, TR, 1), lambda r, p, h: (p, r, 0))
                      for _ in range(4))

    bce_p, inter_p, psum_p, tsum_p = pl.pallas_call(
        kernel,
        out_shape=out_shapes,
        grid_spec=pltpu.PrefetchScalarGridSpec(
            num_scalar_prefetch=0,
            grid=(GR, GP, GH),                       # reduction (HW) axis last
            in_specs=[
                pl.BlockSpec((TR, TH), in_map),
                pl.BlockSpec((TR, TH), in_map),
            ],
            out_specs=out_specs,
        ),
        compiler_params=pltpu.CompilerParams(
            dimension_semantics=("parallel", "parallel", "arbitrary"),
            vmem_limit_bytes=int(vmem_limit),
        ),
    )(pred2d, tgt2d)

    # Tiny epilogue in JAX: fold the parallel HW splits, drop padded rows, and
    # normalize by the *real* element/row counts.
    bce_rows = jnp.sum(bce_p, axis=0)[:R, 0]
    inter_rows = jnp.sum(inter_p, axis=0)[:R, 0]
    psum_rows = jnp.sum(psum_p, axis=0)[:R, 0]
    tsum_rows = jnp.sum(tsum_p, axis=0)[:R, 0]

    smooth = jnp.float32(smooth)
    dice = 1.0 - (2.0 * inter_rows + smooth) / (psum_rows + tsum_rows + smooth)
    return jnp.sum(bce_rows) / jnp.float32(R * HW) + jnp.mean(dice)


def _reference(pred, target, smooth=1.0):
    x = pred.astype(jnp.float32)
    t = target.astype(jnp.float32)
    bce = jnp.mean(jnp.maximum(x, 0.0) - x * t + jnp.log1p(jnp.exp(-jnp.abs(x))))
    p = jax.nn.sigmoid(x)
    inter = (p * t).sum(axis=(2, 3))
    dice = 1.0 - (2.0 * inter + smooth) / (
        p.sum(axis=(2, 3)) + t.sum(axis=(2, 3)) + smooth)
    return bce + dice.mean()


if __name__ == "__main__":
    key = jax.random.PRNGKey(0)

    # Case A: main demo (N, C, H, W) = (2, 4, 16, 16); bf16 binary targets are
    # exact and halve that operand's HBM read traffic (kernel upcasts to f32).
    k1, k2 = jax.random.split(key)
    pred = jax.random.normal(k1, (2, 4, 16, 16), dtype=jnp.float32)      # logits
    target = (jax.random.uniform(k2, (2, 4, 16, 16)) > 0.5).astype(jnp.bfloat16)

    ref = jax.block_until_ready(_reference(pred, target, smooth=1.0))
    exact = jax.block_until_ready(
        dice_bce_loss(pred, target, smooth=1.0, approx_sigmoid=False))
    assert jnp.allclose(exact, ref, rtol=1e-4, atol=1e-5), (exact, ref)
    fast = jax.block_until_ready(dice_bce_loss(pred, target, smooth=1.0))
    assert jnp.allclose(fast, ref, rtol=2e-3, atol=2e-3), (fast, ref)

    # Case B: odd spatial size + forced small tiles -> lane-edge masking and the
    # 2-way parallel HW split (GP=2) are exercised.
    k3, k4 = jax.random.split(k1)
    pred_b = jax.random.normal(k3, (1, 4, 15, 20), dtype=jnp.float32)
    target_b = (jax.random.uniform(k4, (1, 4, 15, 20)) > 0.5).astype(jnp.float32)
    out_b = jax.block_until_ready(
        dice_bce_loss(pred_b, target_b, approx_sigmoid=False, _max_block_elems=2048))
    ref_b = jax.block_until_ready(_reference(pred_b, target_b))
    assert jnp.allclose(out_b, ref_b, rtol=1e-4, atol=1e-5), (out_b, ref_b)

    # Case C: row count not a multiple of the row tile -> row-edge masking.
    k5, k6 = jax.random.split(k2)
    pred_c = jax.random.normal(k5, (2, 5, 16, 16), dtype=jnp.float32)
    target_c = (jax.random.uniform(k6, (2, 5, 16, 16)) > 0.5).astype(jnp.float32)
    out_c = jax.block_until_ready(
        dice_bce_loss(pred_c, target_c, approx_sigmoid=False, _max_block_elems=2048))
    ref_c = jax.block_until_ready(_reference(pred_c, target_c))
    assert jnp.allclose(out_c, ref_c, rtol=1e-4, atol=1e-5), (out_c, ref_c)

    print("KERNEL_OK")
</pallas_src>

<mosaic_0001>
module attributes {stable_mosaic.version = 11 : i64} {
  func.func @_dice_bce_kernel(%arg0: i32, %arg1: i32, %arg2: i32, %arg3: memref<8x256xf32, #tpu.memory_space<vmem>>, %arg4: memref<8x256xbf16, #tpu.memory_space<vmem>>, %arg5: memref<1x8x1xf32, #tpu.memory_space<vmem>>, %arg6: memref<1x8x1xf32, #tpu.memory_space<vmem>>, %arg7: memref<1x8x1xf32, #tpu.memory_space<vmem>>, %arg8: memref<1x8x1xf32, #tpu.memory_space<vmem>>) attributes {dimension_semantics = [#tpu.dimension_semantics<parallel>, #tpu.dimension_semantics<parallel>, #tpu.dimension_semantics<arbitrary>], iteration_bounds = array<i64: 1, 1, 1>, scalar_prefetch = 0 : i64, scratch_operands = 0 : i64, tpu.core_type = #tpu.core_type<tc>, window_params = [{transform_indices = @transform_0, window_bounds = array<i64: 8, 256>}, {transform_indices = @transform_1, window_bounds = array<i64: 8, 256>}, {transform_indices = @transform_2, window_bounds = array<i64: 1, 8, 1>}, {transform_indices = @transform_3, window_bounds = array<i64: 1, 8, 1>}, {transform_indices = @transform_4, window_bounds = array<i64: 1, 8, 1>}, {transform_indices = @transform_5, window_bounds = array<i64: 1, 8, 1>}]} {
    %c0_i32 = arith.constant 0 : i32
    %0 = arith.cmpi eq, %arg2, %c0_i32 : i32
    %1 = arith.extui %0 : i1 to i32
    %c0_i32_0 = arith.constant 0 : i32
    %2 = arith.cmpi ne, %1, %c0_i32_0 : i32
    scf.if %2 {
      %cst_36 = arith.constant 0.000000e+00 : f32
      %56 = vector.broadcast %cst_36 : f32 to vector<8x1xf32>
      %c0_37 = arith.constant 0 : index
      %c0_38 = arith.constant 0 : index
      %c0_39 = arith.constant 0 : index
      %57 = vector.load %arg5[%c0_37, %c0_38, %c0_39] : memref<1x8x1xf32, #tpu.memory_space<vmem>>, vector<1x8x1xf32>
      %58 = vector.shape_cast %57 : vector<1x8x1xf32> to vector<8x1xf32>
      %59 = vector.shape_cast %56 : vector<8x1xf32> to vector<1x8x1xf32>
      tpu.vector_store %arg5[%c0_37, %c0_38, %c0_39], %59 {strides = array<i32>} : memref<1x8x1xf32, #tpu.memory_space<vmem>>, vector<1x8x1xf32>,
      %c0_40 = arith.constant 0 : index
      %c0_41 = arith.constant 0 : index
      %c0_42 = arith.constant 0 : index
      %60 = vector.load %arg6[%c0_40, %c0_41, %c0_42] : memref<1x8x1xf32, #tpu.memory_space<vmem>>, vector<1x8x1xf32>
      %61 = vector.shape_cast %60 : vector<1x8x1xf32> to vector<8x1xf32>
      %62 = vector.shape_cast %56 : vector<8x1xf32> to vector<1x8x1xf32>
      tpu.vector_store %arg6[%c0_40, %c0_41, %c0_42], %62 {strides = array<i32>} : memref<1x8x1xf32, #tpu.memory_space<vmem>>, vector<1x8x1xf32>,
      %c0_43 = arith.constant 0 : index
      %c0_44 = arith.constant 0 : index
      %c0_45 = arith.constant 0 : index
      %63 = vector.load %arg7[%c0_43, %c0_44, %c0_45] : memref<1x8x1xf32, #tpu.memory_space<vmem>>, vector<1x8x1xf32>
      %64 = vector.shape_cast %63 : vector<1x8x1xf32> to vector<8x1xf32>
      %65 = vector.shape_cast %56 : vector<8x1xf32> to vector<1x8x1xf32>
      tpu.vector_store %arg7[%c0_43, %c0_44, %c0_45], %65 {strides = array<i32>} : memref<1x8x1xf32, #tpu.memory_space<vmem>>, vector<1x8x1xf32>,
      %c0_46 = arith.constant 0 : index
      %c0_47 = arith.constant 0 : index
      %c0_48 = arith.constant 0 : index
      %66 = vector.load %arg8[%c0_46, %c0_47, %c0_48] : memref<1x8x1xf32, #tpu.memory_space<vmem>>, vector<1x8x1xf32>
      %67 = vector.shape_cast %66 : vector<1x8x1xf32> to vector<8x1xf32>
      %68 = vector.shape_cast %56 : vector<8x1xf32> to vector<1x8x1xf32>
      tpu.vector_store %arg8[%c0_46, %c0_47, %c0_48], %68 {strides = array<i32>} : memref<1x8x1xf32, #tpu.memory_space<vmem>>, vector<1x8x1xf32>,
    } else {
    }
    %c0 = arith.constant 0 : index
    %c0_1 = arith.constant 0 : index
    %3 = vector.load %arg3[%c0, %c0_1] : memref<8x256xf32, #tpu.memory_space<vmem>>, vector<8x256xf32>
    %c0_2 = arith.constant 0 : index
    %c0_3 = arith.constant 0 : index
    %4 = vector.load %arg4[%c0_2, %c0_3] : memref<8x256xbf16, #tpu.memory_space<vmem>>, vector<8x256xbf16>
    %5 = arith.extf %4 : vector<8x256xbf16> to vector<8x256xf32>
    %6 = math.absf %3 : vector<8x256xf32>
    %cst = arith.constant 0.000000e+00 : f32
    %7 = vector.broadcast %cst : f32 to vector<8x256xf32>
    %8 = arith.subf %7, %6 : vector<8x256xf32>
    %9 = math.exp %8 : vector<8x256xf32>
    %cst_4 = arith.constant 0.000000e+00 : f32
    %10 = vector.broadcast %cst_4 : f32 to vector<8x256xf32>
    %11 = arith.maximumf %3, %10 : vector<8x256xf32>
    %12 = arith.mulf %3, %5 : vector<8x256xf32>
    %13 = arith.subf %11, %12 : vector<8x256xf32>
    %14 = math.log1p %9 : vector<8x256xf32>
    %15 = arith.addf %13, %14 : vector<8x256xf32>
    %cst_5 = arith.constant 0.000000e+00 : f32
    %16 = vector.broadcast %cst_5 : f32 to vector<8x256xf32>
    %17 = arith.cmpf oge, %3, %16 : vector<8x256xf32>
    %cst_6 = arith.constant 1.000000e+00 : f32
    %18 = vector.broadcast %cst_6 : f32 to vector<8x256xf32>
    %19 = arith.select %17, %18, %9 : vector<8x256xi1>, vector<8x256xf32>
    %cst_7 = arith.constant 1.000000e+00 : f32
    %20 = vector.broadcast %cst_7 : f32 to vector<8x256xf32>
    %21 = arith.addf %20, %9 : vector<8x256xf32>
    %22 = arith.divf %19, %21 : vector<8x256xf32>
    %c0_8 = arith.constant 0 : index
    %c0_9 = arith.constant 0 : index
    %c0_10 = arith.constant 0 : index
    %23 = vector.load %arg5[%c0_8, %c0_9, %c0_10] : memref<1x8x1xf32, #tpu.memory_space<vmem>>, vector<1x8x1xf32>
    %24 = vector.shape_cast %23 : vector<1x8x1xf32> to vector<8x1xf32>
    %cst_11 = arith.constant dense<0.000000e+00> : vector<8xf32>
    %25 = vector.multi_reduction <add>, %15, %cst_11 [1] : vector<8x256xf32> to vector<8xf32>
    %26 = vector.shape_cast %25 : vector<8xf32> to vector<8x1xf32>
    %27 = arith.addf %24, %26 : vector<8x1xf32>
    %c0_12 = arith.constant 0 : index
    %c0_13 = arith.constant 0 : index
    %c0_14 = arith.constant 0 : index
    %28 = vector.load %arg5[%c0_12, %c0_13, %c0_14] : memref<1x8x1xf32, #tpu.memory_space<vmem>>, vector<1x8x1xf32>
    %29 = vector.shape_cast %28 : vector<1x8x1xf32> to vector<8x1xf32>
    %30 = vector.shape_cast %27 : vector<8x1xf32> to vector<1x8x1xf32>
    tpu.vector_store %arg5[%c0_12, %c0_13, %c0_14], %30 {strides = array<i32>} : memref<1x8x1xf32, #tpu.memory_space<vmem>>, vector<1x8x1xf32>,
    %c0_15 = arith.constant 0 : index
    %c0_16 = arith.constant 0 : index
    %c0_17 = arith.constant 0 : index
    %31 = vector.load %arg6[%c0_15, %c0_16, %c0_17] : memref<1x8x1xf32, #tpu.memory_space<vmem>>, vector<1x8x1xf32>
    %32 = vector.shape_cast %31 : vector<1x8x1xf32> to vector<8x1xf32>
    %33 = arith.mulf %22, %5 : vector<8x256xf32>
    %cst_18 = arith.constant dense<0.000000e+00> : vector<8xf32>
    %34 = vector.multi_reduction <add>, %33, %cst_18 [1] : vector<8x256xf32> to vector<8xf32>
    %35 = vector.shape_cast %34 : vector<8xf32> to vector<8x1xf32>
    %36 = arith.addf %32, %35 : vector<8x1xf32>
    %c0_19 = arith.constant 0 : index
    %c0_20 = arith.constant 0 : index
    %c0_21 = arith.constant 0 : index
    %37 = vector.load %arg6[%c0_19, %c0_20, %c0_21] : memref<1x8x1xf32, #tpu.memory_space<vmem>>, vector<1x8x1xf32>
    %38 = vector.shape_cast %37 : vector<1x8x1xf32> to vector<8x1xf32>
    %39 = vector.shape_cast %36 : vector<8x1xf32> to vector<1x8x1xf32>
    tpu.vector_store %arg6[%c0_19, %c0_20, %c0_21], %39 {strides = array<i32>} : memref<1x8x1xf32, #tpu.memory_space<vmem>>, vector<1x8x1xf32>,
    %c0_22 = arith.constant 0 : index
    %c0_23 = arith.constant 0 : index
    %c0_24 = arith.constant 0 : index
    %40 = vector.load %arg7[%c0_22, %c0_23, %c0_24] : memref<1x8x1xf32, #tpu.memory_space<vmem>>, vector<1x8x1xf32>
    %41 = vector.shape_cast %40 : vector<1x8x1xf32> to vector<8x1xf32>
    %cst_25 = arith.constant dense<0.000000e+00> : vector<8xf32>
    %42 = vector.multi_reduction <add>, %22, %cst_25 [1] : vector<8x256xf32> to vector<8xf32>
    %43 = vector.shape_cast %42 : vector<8xf32> to vector<8x1xf32>
    %44 = arith.addf %41, %43 : vector<8x1xf32>
    %c0_26 = arith.constant 0 : index
    %c0_27 = arith.constant 0 : index
    %c0_28 = arith.constant 0 : index
    %45 = vector.load %arg7[%c0_26, %c0_27, %c0_28] : memref<1x8x1xf32, #tpu.memory_space<vmem>>, vector<1x8x1xf32>
    %46 = vector.shape_cast %45 : vector<1x8x1xf32> to vector<8x1xf32>
    %47 = vector.shape_cast %44 : vector<8x1xf32> to vector<1x8x1xf32>
    tpu.vector_store %arg7[%c0_26, %c0_27, %c0_28], %47 {strides = array<i32>} : memref<1x8x1xf32, #tpu.memory_space<vmem>>, vector<1x8x1xf32>,
    %c0_29 = arith.constant 0 : index
    %c0_30 = arith.constant 0 : index
    %c0_31 = arith.constant 0 : index
    %48 = vector.load %arg8[%c0_29, %c0_30, %c0_31] : memref<1x8x1xf32, #tpu.memory_space<vmem>>, vector<1x8x1xf32>
    %49 = vector.shape_cast %48 : vector<1x8x1xf32> to vector<8x1xf32>
    %cst_32 = arith.constant dense<0.000000e+00> : vector<8xf32>
    %50 = vector.multi_reduction <add>, %5, %cst_32 [1] : vector<8x256xf32> to vector<8xf32>
    %51 = vector.shape_cast %50 : vector<8xf32> to vector<8x1xf32>
    %52 = arith.addf %49, %51 : vector<8x1xf32>
    %c0_33 = arith.constant 0 : index
    %c0_34 = arith.constant 0 : index
    %c0_35 = arith.constant 0 : index
    %53 = vector.load %arg8[%c0_33, %c0_34, %c0_35] : memref<1x8x1xf32, #tpu.memory_space<vmem>>, vector<1x8x1xf32>
    %54 = vector.shape_cast %53 : vector<1x8x1xf32> to vector<8x1xf32>
    %55 = vector.shape_cast %52 : vector<8x1xf32> to vector<1x8x1xf32>
    tpu.vector_store %arg8[%c0_33, %c0_34, %c0_35], %55 {strides = array<i32>} : memref<1x8x1xf32, #tpu.memory_space<vmem>>, vector<1x8x1xf32>,
    return
  }
  func.func @transform_0(%arg0: i32, %arg1: i32, %arg2: i32) -> (i32, i32) {
    %c1_i32 = arith.constant 1 : i32
    %0 = arith.muli %arg1, %c1_i32 : i32
    %1 = arith.addi %0, %arg2 : i32
    %c0_i32 = arith.constant 0 : i32
    return %arg0, %1 : i32, i32
  }
  func.func @transform_1(%arg0: i32, %arg1: i32, %arg2: i32) -> (i32, i32) {
    %c1_i32 = arith.constant 1 : i32
    %0 = arith.muli %arg1, %c1_i32 : i32
    %1 = arith.addi %0, %arg2 : i32
    %c0_i32 = arith.constant 0 : i32
    return %arg0, %1 : i32, i32
  }
  func.func @transform_2(%arg0: i32, %arg1: i32, %arg2: i32) -> (i32, i32, i32) {
    %c0_i32 = arith.constant 0 : i32
    %c0_i32_0 = arith.constant 0 : i32
    return %arg1, %arg0, %c0_i32 : i32, i32, i32
  }
  func.func @transform_3(%arg0: i32, %arg1: i32, %arg2: i32) -> (i32, i32, i32) {
    %c0_i32 = arith.constant 0 : i32
    %c0_i32_0 = arith.constant 0 : i32
    return %arg1, %arg0, %c0_i32 : i32, i32, i32
  }
  func.func @transform_4(%arg0: i32, %arg1: i32, %arg2: i32) -> (i32, i32, i32) {
    %c0_i32 = arith.constant 0 : i32
    %c0_i32_0 = arith.constant 0 : i32
    return %arg1, %arg0, %c0_i32 : i32, i32, i32
  }
  func.func @transform_5(%arg0: i32, %arg1: i32, %arg2: i32) -> (i32, i32, i32) {
    %c0_i32 = arith.constant 0 : i32
    %c0_i32_0 = arith.constant 0 : i32
    return %arg1, %arg0, %c0_i32 : i32, i32, i32
  }
}

</mosaic_0001>

<llo_original>
// kernel: tpu_custom_call.1
$region0: #{tpu_custom_call.1}
  #allocation0 [shape = 'u32[]', space=smem, size = 0x4, offset = 0x4, fixed_abs, tag = 'smem constant byte address 0x4 - core index']
  #allocation1 [shape = 'u32[72,128]{1,0:T(1,128)}', space=vmem, size = 0x9000, scoped, tag = 'internal scratch']
  %s0 = inlined_call_operand.hbm [shape: f32[8,256], index: 0, kind: input, shape index: {}]
  %s1 = inlined_call_operand.hbm [shape: bf16[8,256], index: 1, kind: input, shape index: {}]
  %s2 = inlined_call_operand.vmem [shape: f32[1,8,1], index: 2, kind: output, shape index: {0}]
  %s3 = inlined_call_operand.vmem [shape: f32[1,8,1], index: 3, kind: output, shape index: {1}]
  %s4 = inlined_call_operand.vmem [shape: f32[1,8,1], index: 4, kind: output, shape index: {2}]
  %s5 = inlined_call_operand.vmem [shape: f32[1,8,1], index: 5, kind: output, shape index: {3}]
  %6 = xla_tuple %s2, %s3, %s4, %s5
  %s7 = sld [smem:[#allocation0]]
  $region54: #{tpu_custom_call.1} parent=0
    _
  %s9 = ssub.s32 1, %s7
  %s10 = scalar_select 0, %s9, %s7
  $region1: #{tpu_custom_call.1} parent=0
    #allocation2 [shape = 'u8[8192]{0}', space=vmem, size = 0x2000, scoped, tag = 'input window, operand 0, single buffered']
    #allocation3 [shape = 's32[1]{0}', space=sflag, size = 0x4, scoped, tag = 'scoped memory for tpu_custom_call.1']
    #allocation4 [shape = 'u8[4096]{0}', space=vmem, size = 0x1000, scoped, tag = 'input window, operand 1, single buffered']
    #allocation5 [shape = 's32[1]{0}', space=sflag, size = 0x4, scoped, tag = 'scoped memory for tpu_custom_call.1']
    %11 = vsyncpa [#allocation3], 0
    %12 = vsyncpa [#allocation5], 0
    // Predicated region
    $region2: #{tpu_custom_call.1} parent=1 // pred_check
      _
    $region3: #{tpu_custom_call.1} parent=1 // pred_check_branch
      %14 = sbr.rel (0) target = $region5
    $region4: #{tpu_custom_call.1} parent=1 // pred_region
      %s15 = sadd.s32 0, 0
      %s16 = smul.u32 2, %s15
      %18 = vsyncadd [#allocation3], 0
      %s19 = smul.addr %s16, 8
      %s20 = scalar_lea.hbm %s0, %s19
      %s22 = sshll.u32 %s20, 4
      %s23 = int_to_ptr.hbm [resolvable:$true] %s22
      %s24 = sshll.u32 [#allocation2], 4
      %s25 = int_to_ptr.vmem [resolvable:$true] %s24
      %27 = dma.hbm_to_vmem [thread:$0]  %s23, 256, %s25, [#allocation3]
    $region5: #{tpu_custom_call.1} parent=1 // pred_fallthru
      _
    // Predicated region
    $region6: #{tpu_custom_call.1} parent=1 // pred_check
      _
    $region7: #{tpu_custom_call.1} parent=1 // pred_check_branch
      %29 = sbr.rel (0) target = $region9
    $region8: #{tpu_custom_call.1} parent=1 // pred_region
      %s30 = sadd.s32 0, 0
      %s31 = smul.u32 2, %s30
      %33 = vsyncadd [#allocation5], 0
      %s34 = smul.addr %s31, 4
      %s35 = scalar_lea.hbm %s1, %s34
      %s37 = sshll.u32 %s35, 4
      %s38 = int_to_ptr.hbm [resolvable:$true] %s37
      %s39 = sshll.u32 [#allocation4], 4
      %s40 = int_to_ptr.vmem [resolvable:$true] %s39
      %42 = dma.hbm_to_vmem [thread:$0]  %s38, 128, %s40, [#allocation5]
    $region9: #{tpu_custom_call.1} parent=1 // pred_fallthru
      _
    // Predicated region
    $region10: #{tpu_custom_call.1} parent=1 // pred_check
      _
    $region11: #{tpu_custom_call.1} parent=1 // pred_check_branch
      %44 = sbr.rel (0) target = $region13
    $region12: #{tpu_custom_call.1} parent=1 // pred_region
      %46 = dma.done [#allocation3], 256
    $region13: #{tpu_custom_call.1} parent=1 // pred_fallthru
      _
    // Predicated region
    $region14: #{tpu_custom_call.1} parent=1 // pred_check
      _
    $region15: #{tpu_custom_call.1} parent=1 // pred_check_branch
      %48 = sbr.rel (0) target = $region17
    $region16: #{tpu_custom_call.1} parent=1 // pred_region
      %50 = dma.done [#allocation5], 128
    $region17: #{tpu_custom_call.1} parent=1 // pred_fallthru
      _
    %s51 = sadd.s32 0, 0
    %s52 = smul.u32 2, %s51
    %s53 = sadd.s32 0, 0
    %s54 = smul.u32 2, %s53
    %p55 = scmp.eq.s32.totalorder 0, 0
    // Predicated region
    $region18: #{tpu_custom_call.1} parent=1 // pred_check
      %p56 = pneg %p55
    $region19: #{tpu_custom_call.1} parent=1 // pred_check_branch
      %58 = sbr.rel (%p56) target = $region21
    $region20: #{tpu_custom_call.1} parent=1 // pred_region
      %vm59 = vcmask 7168
      %60 = vst.msk [vmem:[%s2] sm:$0xff] %vm59, 0.0
      %61 = vst.msk [vmem:[%s3] sm:$0xff] %vm59, 0.0
      %62 = vst.msk [vmem:[%s4] sm:$0xff] %vm59, 0.0
      %63 = vst.msk [vmem:[%s5] sm:$0xff] %vm59, 0.0
    $region21: #{tpu_custom_call.1} parent=1 // pred_fallthru
      _
    %v64 = vld [vmem:[#allocation2] sm:$0xff]
    %v65 = vld [vmem:[#allocation2 + $0x8] sm:$0xff]
    %v66 = vld [vmem:[#allocation4] sm:$0xff]
    %v67 = vunpack.c.l.bf16 %v66
    %v68 = vunpack.c.h.bf16 %v66
    %v69 = vand.u32 2147483647, %v64
    %v70 = vand.u32 2147483647, %v65
    %v71 = vsub.f32 0.0, %v69
    %v72 = vsub.f32 0.0, %v70
    %v73 = vmul.f32 %v71, 1.442695
    %v74 = vpow.pop %v73
    %v75 = vmul.f32 %v72, 1.442695
    %v76 = vpow.pop %v75
    %v77 = vmax.f32 %v64, 0.0
    %v78 = vmax.f32 %v65, 0.0
    %v79 = vmul.f32 %v64, %v67
    %v80 = vmul.f32 %v65, %v68
    %v81 = vsub.f32 %v77, %v79
    %v82 = vsub.f32 %v78, %v80
    %v83 = vadd.f32 %v74, 1.0
    %v84 = vlog2.pop %v83
    %v85 = vmul.f32 %v84, 0.6931472
    %v86 = vmul.f32 -0.5, %v74
    %v87 = vadd.f32 %v86, 1.0
    %v88 = vmul.f32 %v87, %v74
    %v89 = vand.u32 2147483647, %v74
    %vm90 = vcmp.lt.f32.partialorder %v89, 0.0004427343
    %v91 = vsel %vm90, %v88, %v85
    %v92 = vadd.f32 %v76, 1.0
    %v93 = vlog2.pop %v92
    %v94 = vmul.f32 %v93, 0.6931472
    %v95 = vmul.f32 -0.5, %v76
    %v96 = vadd.f32 %v95, 1.0
    %v97 = vmul.f32 %v96, %v76
    %v98 = vand.u32 2147483647, %v76
    %vm99 = vcmp.lt.f32.partialorder %v98, 0.0004427343
    %v100 = vsel %vm99, %v97, %v94
    %v101 = vadd.f32 %v81, %v91
    %v102 = vadd.f32 %v82, %v100
    %vm103 = vcmp.ge.f32.partialorder %v64, 0.0
    %vm104 = vcmp.ge.f32.partialorder %v65, 0.0
    %v105 = vsel %vm103, 1.0, %v74
    %v106 = vsel %vm104, 1.0, %v76
    %v107 = vadd.f32 %v74, 1.0
    %v108 = vadd.f32 %v76, 1.0
    %v109 = vrcp.pop %v107
    %v110 = vmul.f32 %v107, %v109
    %v111 = vsub.f32 1.0, %v110
    %v112 = vmul.f32 %v109, %v111
    %v113 = vadd.f32 %v109, %v112
    %vm114 = vweird.f32 %v107
    %vm115 = vweird.f32 %v109
    %vm116 = vmor %vm114, %vm115
    %v117 = vsel %vm116, %v109, %v113
    %v118 = vand.u32 2147483647, %v107
    %vm119 = vcmp.eq.f32.partialorder %v118, 8.507059e+37
    %v120 = vand.u32 %v107, 2147483648
    %v121 = vor.u32 1.1754944e-38, %v120
    %v122 = vsel %vm119, %v121, %v117
    %v123 = vmul.f32 %v105, %v122
    %v124 = vrcp.pop %v108
    %v125 = vmul.f32 %v108, %v124
    %v126 = vsub.f32 1.0, %v125
    %v127 = vmul.f32 %v124, %v126
    %v128 = vadd.f32 %v124, %v127
    %vm129 = vweird.f32 %v108
    %vm130 = vweird.f32 %v124
    %vm131 = vmor %vm129, %vm130
    %v132 = vsel %vm131, %v124, %v128
    %v133 = vand.u32 2147483647, %v108
    %vm134 = vcmp.eq.f32.partialorder %v133, 8.507059e+37
    %v135 = vand.u32 %v108, 2147483648
    %v136 = vor.u32 1.1754944e-38, %v135
    %v137 = vsel %vm134, %v136, %v132
    %v138 = vmul.f32 %v106, %v137
    %v139 = vld [vmem:[%s2] sm:$0xff]
    %v140 = vadd.f32 %v101, %v102
    %141 = vadd.xlane.f32.xlu0 %v140
    %v142 = vpop.xlane.xlu0 %141
    %v143 = vadd.f32 %v139, %v142
    %vm144 = vcmask 7168
    %145 = vst.msk [vmem:[%s2] sm:$0xff] %vm144, %v143
    %v146 = vld [vmem:[%s3] sm:$0xff]
    %v147 = vmul.f32 %v123, %v67
    %v148 = vmul.f32 %v138, %v68
    %v149 = vadd.f32 %v147, %v148
    %150 = vadd.xlane.f32.xlu0 %v149
    %v151 = vpop.xlane.xlu0 %150
    %v152 = vadd.f32 %v146, %v151
    %153 = vst.msk [vmem:[%s3] sm:$0xff] %vm144, %v152
    %v154 = vld [vmem:[%s4] sm:$0xff]
    %v155 = vadd.f32 %v123, %v138
    %156 = vadd.xlane.f32.xlu0 %v155
    %v157 = vpop.xlane.xlu0 %156
    %v158 = vadd.f32 %v154, %v157
    %159 = vst.msk [vmem:[%s4] sm:$0xff] %vm144, %v158
    %v160 = vld [vmem:[%s5] sm:$0xff]
    %v161 = vadd.f32 %v67, %v68
    %162 = vadd.xlane.f32.xlu0 %v161
    %v163 = vpop.xlane.xlu0 %162
    %v164 = vadd.f32 %v160, %v163
    %165 = vst.msk [vmem:[%s5] sm:$0xff] %vm144, %v164
    // Predicated region
    $region22: #{tpu_custom_call.1} parent=1 // pred_check
      _
    $region23: #{tpu_custom_call.1} parent=1 // pred_check_branch
      %167 = sbr.rel (0) target = $region25
    $region24: #{tpu_custom_call.1} parent=1 // pred_region
      _
    $region25: #{tpu_custom_call.1} parent=1 // pred_fallthru
      _
    // Predicated region
    $region26: #{tpu_custom_call.1} parent=1 // pred_check
      _
    $region27: #{tpu_custom_call.1} parent=1 // pred_check_branch
      %169 = sbr.rel (0) target = $region29
    $region28: #{tpu_custom_call.1} parent=1 // pred_region
      _
    $region29: #{tpu_custom_call.1} parent=1 // pred_fallthru
      _
    // Predicated region
    $region30: #{tpu_custom_call.1} parent=1 // pred_check
      _
    $region31: #{tpu_custom_call.1} parent=1 // pred_check_branch
      %171 = sbr.rel (0) target = $region33
    $region32: #{tpu_custom_call.1} parent=1 // pred_region
      _
    $region33: #{tpu_custom_call.1} parent=1 // pred_fallthru
      _
    // Predicated region
    $region34: #{tpu_custom_call.1} parent=1 // pred_check
      _
    $region35: #{tpu_custom_call.1} parent=1 // pred_check_branch
      %173 = sbr.rel (0) target = $region37
    $region36: #{tpu_custom_call.1} parent=1 // pred_region
      _
    $region37: #{tpu_custom_call.1} parent=1 // pred_fallthru
      _
    // Predicated region
    $region38: #{tpu_custom_call.1} parent=1 // pred_check
      _
    $region39: #{tpu_custom_call.1} parent=1 // pred_check_branch
      %175 = sbr.rel (0) target = $region41
    $region40: #{tpu_custom_call.1} parent=1 // pred_region
      _
    $region41: #{tpu_custom_call.1} parent=1 // pred_fallthru
      _
    // Predicated region
    $region42: #{tpu_custom_call.1} parent=1 // pred_check
      _
    $region43: #{tpu_custom_call.1} parent=1 // pred_check_branch
      %177 = sbr.rel (0) target = $region45
    $region44: #{tpu_custom_call.1} parent=1 // pred_region
      _
    $region45: #{tpu_custom_call.1} parent=1 // pred_fallthru
      _
    // Predicated region
    $region46: #{tpu_custom_call.1} parent=1 // pred_check
      _
    $region47: #{tpu_custom_call.1} parent=1 // pred_check_branch
      %179 = sbr.rel (0) target = $region49
    $region48: #{tpu_custom_call.1} parent=1 // pred_region
      _
    $region49: #{tpu_custom_call.1} parent=1 // pred_fallthru
      _
    // Predicated region
    $region50: #{tpu_custom_call.1} parent=1 // pred_check
      _
    $region51: #{tpu_custom_call.1} parent=1 // pred_check_branch
      %181 = sbr.rel (0) target = $region53
    $region52: #{tpu_custom_call.1} parent=1 // pred_region
      _
    $region53: #{tpu_custom_call.1} parent=1 // pred_fallthru
      _
    %182 = vsyncpa [#allocation3], 1
    %183 = vsyncpa [#allocation5], 1

</llo_original>
